<compile_context>
chip_gen: v7x
topology: tpu7x:2x2x1
jax: 0.10.0
libtpu: 0.0.40
codegen_flags: <defaults>
</compile_context>

<pallas_src>
import jax
import jax.numpy as jnp
from jax.experimental import pallas as pl
from jax.experimental.pallas import tpu as pltpu


def _round_up(a: int, b: int) -> int:
    return (a + b - 1) // b * b


def _vae_loss_kernel(scales_ref,                       # SMEM (2,) [mse_scale, beta]
                     x_ref, xr_ref,                    # (TM, V) targets / logits
                     y_ref, yh_ref, zm_ref, zl_ref,    # small tensors, VMEM-resident
                     out_ref,                          # SMEM (1, 1) scalar out
                     acc_ref):                         # SMEM (1, 1) scratch accumulator
    i = pl.program_id(0)

    # KL + MSE computed exactly once (their inputs are pinned across the grid).
    @pl.when(i == 0)
    def _init():
        mse_scale = scales_ref[0]
        beta = scales_ref[1]
        zm = zm_ref[...].astype(jnp.float32)
        zl = zl_ref[...].astype(jnp.float32)
        kld = -0.5 * jnp.sum(1.0 + zl - zm * zm - jnp.exp(zl))
        diff = yh_ref[...].astype(jnp.float32) - y_ref[...].astype(jnp.float32)
        mse = jnp.sum(diff * diff)
        acc_ref[0, 0] = beta * kld + mse_scale * mse

    # ---- cross entropy with soft targets (reduction='sum'), lse form ----
    logits = xr_ref[...].astype(jnp.float32)        # (TM, V)
    targets = x_ref[...].astype(jnp.float32)        # (TM, V) probabilities
    m = jnp.max(logits, axis=-1, keepdims=True)
    lse = m + jnp.log(jnp.sum(jnp.exp(logits - m), axis=-1, keepdims=True))
    tsum = jnp.sum(targets, axis=-1, keepdims=True)
    ce_partial = jnp.sum(lse * tsum) - jnp.sum(targets * logits)
    acc_ref[0, 0] += ce_partial

    # Output block index is constant -> single HBM writeback after last step.
    out_ref[0, 0] = acc_ref[0, 0]


def vae_loss(x, x_recon, y, y_hat, z_mean, z_logvar, mse_scale, beta):
    """Pallas implementation of VAELoss.forward (returns scalar f32).

    mse_scale / beta are runtime scalars (no recompile when beta anneals).
    """
    B, S, V = x.shape
    rows = B * S
    x2 = x.reshape(rows, V)
    xr2 = x_recon.reshape(rows, V)
    y2 = y if y.ndim == 2 else y.reshape(B, -1)
    yh2 = y_hat if y_hat.ndim == 2 else y_hat.reshape(B, -1)

    # Row-tile size: keep 2 big inputs x 2 pipeline buffers <= ~12 MiB VMEM.
    itemsize = max(jnp.dtype(x2.dtype).itemsize, jnp.dtype(xr2.dtype).itemsize)
    budget = 12 * 1024 * 1024
    tm_cap = max(8, (budget // (4 * V * itemsize)) // 8 * 8)
    tm = int(min(tm_cap, 512, _round_up(rows, 8)))
    rows_padded = _round_up(rows, tm)
    if rows_padded != rows:
        pad = rows_padded - rows
        # Zero-padded target rows contribute exactly 0 to the lse-form CE.
        x2 = jnp.pad(x2, ((0, pad), (0, 0)))
        xr2 = jnp.pad(xr2, ((0, pad), (0, 0)))
    n_steps = rows_padded // tm

    scales = jnp.asarray([mse_scale, beta], dtype=jnp.float32)

    grid_spec = pltpu.PrefetchScalarGridSpec(
        num_scalar_prefetch=1,
        grid=(n_steps,),
        in_specs=[
            pl.BlockSpec((tm, V), lambda i, s: (i, 0)),          # targets tile
            pl.BlockSpec((tm, V), lambda i, s: (i, 0)),          # logits tile
            pl.BlockSpec(y2.shape, lambda i, s: (0, 0)),         # y (pinned)
            pl.BlockSpec(yh2.shape, lambda i, s: (0, 0)),        # y_hat (pinned)
            pl.BlockSpec(z_mean.shape, lambda i, s: (0, 0)),     # z_mean (pinned)
            pl.BlockSpec(z_logvar.shape, lambda i, s: (0, 0)),   # z_logvar (pinned)
        ],
        out_specs=pl.BlockSpec((1, 1), lambda i, s: (0, 0),
                               memory_space=pltpu.MemorySpace.SMEM),
        scratch_shapes=[pltpu.SMEM((1, 1), jnp.float32)],
    )

    out = pl.pallas_call(
        _vae_loss_kernel,
        out_shape=jax.ShapeDtypeStruct((1, 1), jnp.float32),
        grid_spec=grid_spec,
        compiler_params=pltpu.CompilerParams(
            dimension_semantics=("arbitrary",)),
    )(scales, x2, xr2, y2, yh2, z_mean, z_logvar)
    return out[0, 0]


def _beta_for_step(step_count, beta_max, beta_start, beta_end):
    """Mirror of VAELoss.get_beta() (host-side schedule; returns a float)."""
    step_size = beta_max / max(beta_end - beta_start, 1)
    if step_count < beta_start:
        return 0.0
    elif step_count >= beta_end:
        return beta_max
    return step_size * (step_count - beta_start)


def _reference(x, x_recon, y, y_hat, z_mean, z_logvar, mse_scale, beta):
    logp = jax.nn.log_softmax(x_recon.astype(jnp.float32), axis=-1)
    ce = -jnp.sum(x.astype(jnp.float32) * logp)
    kld = -0.5 * jnp.sum(1.0 + z_logvar - z_mean ** 2 - jnp.exp(z_logvar))
    mse = mse_scale * jnp.sum((y_hat - y) ** 2)
    return ce + beta * kld + mse


if __name__ == "__main__":
    key = jax.random.PRNGKey(0)
    kx, kr, ky, kyh, kzm, kzl = jax.random.split(key, 6)

    B, S, V = 2, 8, 16      # batch, sequence, vocab (class dim)
    L, T = 32, 4            # latent dim, regression targets

    # Soft probability targets for x (F.cross_entropy with probability targets).
    x = jax.nn.softmax(jax.random.normal(kx, (B, S, V)) * 4.0, axis=-1)
    x_recon = jax.random.normal(kr, (B, S, V))            # logits
    y = jax.random.normal(ky, (B, T))
    y_hat = jax.random.normal(kyh, (B, T))
    z_mean = jax.random.normal(kzm, (B, L)) * 0.5
    z_logvar = jax.random.normal(kzl, (B, L)) * 0.1

    mse_scale = 1.0
    # VAELoss defaults: beta_max=1.0, beta_start=0, beta_end=0, step_count=0
    beta = _beta_for_step(0, beta_max=1.0, beta_start=0, beta_end=0)

    loss = vae_loss(x, x_recon, y, y_hat, z_mean, z_logvar, mse_scale, beta)
    loss = jax.block_until_ready(loss)
    ref = _reference(x, x_recon, y, y_hat, z_mean, z_logvar, mse_scale, beta)
    assert jnp.allclose(loss, ref, rtol=1e-4, atol=1e-4), (loss, ref)

    # Second call with a different (annealed) beta exercises the runtime
    # scalar path (no retrace / recompile).
    beta2 = 0.37
    loss2 = vae_loss(x, x_recon, y, y_hat, z_mean, z_logvar, mse_scale, beta2)
    loss2 = jax.block_until_ready(loss2)
    ref2 = _reference(x, x_recon, y, y_hat, z_mean, z_logvar, mse_scale, beta2)
    assert jnp.allclose(loss2, ref2, rtol=1e-4, atol=1e-4), (loss2, ref2)

    print("KERNEL_OK")
</pallas_src>

<mosaic_0001>
module attributes {stable_mosaic.version = 11 : i64} {
  func.func @_vae_loss_kernel(%arg0: i32, %arg1: memref<2xf32, #tpu.memory_space<smem>>, %arg2: memref<16x16xf32, #tpu.memory_space<vmem>>, %arg3: memref<16x16xf32, #tpu.memory_space<vmem>>, %arg4: memref<2x4xf32, #tpu.memory_space<vmem>>, %arg5: memref<2x4xf32, #tpu.memory_space<vmem>>, %arg6: memref<2x32xf32, #tpu.memory_space<vmem>>, %arg7: memref<2x32xf32, #tpu.memory_space<vmem>>, %arg8: memref<1x1xf32, #tpu.memory_space<smem>>, %arg9: memref<1x1xf32, #tpu.memory_space<smem>>) attributes {dimension_semantics = [#tpu.dimension_semantics<arbitrary>], iteration_bounds = array<i64: 1>, scalar_prefetch = 1 : i64, scratch_operands = 1 : i64, tpu.core_type = #tpu.core_type<tc>, window_params = [{transform_indices = @transform_0, window_bounds = array<i64: 16, 16>}, {transform_indices = @transform_1, window_bounds = array<i64: 16, 16>}, {pipeline_mode = #tpu.pipeline_mode<synchronous>, transform_indices = @transform_2, window_bounds = array<i64: 2, 4>}, {pipeline_mode = #tpu.pipeline_mode<synchronous>, transform_indices = @transform_3, window_bounds = array<i64: 2, 4>}, {pipeline_mode = #tpu.pipeline_mode<synchronous>, transform_indices = @transform_4, window_bounds = array<i64: 2, 32>}, {pipeline_mode = #tpu.pipeline_mode<synchronous>, transform_indices = @transform_5, window_bounds = array<i64: 2, 32>}, {transform_indices = @transform_6, window_bounds = array<i64: 1, 1>}]} {
    %c0_i32 = arith.constant 0 : i32
    %0 = arith.cmpi eq, %arg0, %c0_i32 : i32
    %1 = arith.extui %0 : i1 to i32
    %c0_i32_0 = arith.constant 0 : i32
    %2 = arith.cmpi ne, %1, %c0_i32_0 : i32
    scf.if %2 {
      %c0_16 = arith.constant 0 : index
      %32 = memref.load %arg1[%c0_16] : memref<2xf32, #tpu.memory_space<smem>>
      %c1 = arith.constant 1 : index
      %33 = memref.load %arg1[%c1] : memref<2xf32, #tpu.memory_space<smem>>
      %c0_17 = arith.constant 0 : index
      %c0_18 = arith.constant 0 : index
      %34 = vector.load %arg6[%c0_17, %c0_18] : memref<2x32xf32, #tpu.memory_space<vmem>>, vector<2x32xf32>
      %c0_19 = arith.constant 0 : index
      %c0_20 = arith.constant 0 : index
      %35 = vector.load %arg7[%c0_19, %c0_20] : memref<2x32xf32, #tpu.memory_space<vmem>>, vector<2x32xf32>
      %cst_21 = arith.constant 1.000000e+00 : f32
      %36 = vector.broadcast %cst_21 : f32 to vector<2x32xf32>
      %37 = arith.addf %36, %35 : vector<2x32xf32>
      %38 = arith.mulf %34, %34 : vector<2x32xf32>
      %39 = arith.subf %37, %38 : vector<2x32xf32>
      %40 = math.exp %35 : vector<2x32xf32>
      %41 = arith.subf %39, %40 : vector<2x32xf32>
      %42 = vector.shape_cast %41 : vector<2x32xf32> to vector<1x2x32xf32>
      %cst_22 = arith.constant dense<0.000000e+00> : vector<1xf32>
      %43 = vector.multi_reduction <add>, %42, %cst_22 [1, 2] : vector<1x2x32xf32> to vector<1xf32>
      %44 = vector.shape_cast %43 : vector<1xf32> to vector<1x1x1xf32>
      %45 = vector.extract %44[0, 0, 0] : f32 from vector<1x1x1xf32>
      %cst_23 = arith.constant -5.000000e-01 : f32
      %46 = arith.mulf %cst_23, %45 : f32
      %c0_24 = arith.constant 0 : index
      %c0_25 = arith.constant 0 : index
      %47 = vector.load %arg5[%c0_24, %c0_25] : memref<2x4xf32, #tpu.memory_space<vmem>>, vector<2x4xf32>
      %c0_26 = arith.constant 0 : index
      %c0_27 = arith.constant 0 : index
      %48 = vector.load %arg4[%c0_26, %c0_27] : memref<2x4xf32, #tpu.memory_space<vmem>>, vector<2x4xf32>
      %49 = arith.subf %47, %48 : vector<2x4xf32>
      %50 = arith.mulf %49, %49 : vector<2x4xf32>
      %51 = vector.shape_cast %50 : vector<2x4xf32> to vector<1x2x4xf32>
      %cst_28 = arith.constant dense<0.000000e+00> : vector<1xf32>
      %52 = vector.multi_reduction <add>, %51, %cst_28 [1, 2] : vector<1x2x4xf32> to vector<1xf32>
      %53 = vector.shape_cast %52 : vector<1xf32> to vector<1x1x1xf32>
      %54 = vector.extract %53[0, 0, 0] : f32 from vector<1x1x1xf32>
      %55 = arith.mulf %33, %46 : f32
      %56 = arith.mulf %32, %54 : f32
      %57 = arith.addf %55, %56 : f32
      %c0_29 = arith.constant 0 : index
      %c0_30 = arith.constant 0 : index
      %58 = memref.load %arg9[%c0_29, %c0_30] : memref<1x1xf32, #tpu.memory_space<smem>>
      memref.store %57, %arg9[%c0_29, %c0_30] : memref<1x1xf32, #tpu.memory_space<smem>>
    } else {
    }
    %c0 = arith.constant 0 : index
    %c0_1 = arith.constant 0 : index
    %3 = vector.load %arg3[%c0, %c0_1] : memref<16x16xf32, #tpu.memory_space<vmem>>, vector<16x16xf32>
    %c0_2 = arith.constant 0 : index
    %c0_3 = arith.constant 0 : index
    %4 = vector.load %arg2[%c0_2, %c0_3] : memref<16x16xf32, #tpu.memory_space<vmem>>, vector<16x16xf32>
    %cst = arith.constant dense<0xFF800000> : vector<16xf32>
    %5 = vector.multi_reduction <maximumf>, %3, %cst [1] : vector<16x16xf32> to vector<16xf32>
    %6 = vector.shape_cast %5 : vector<16xf32> to vector<16x1xf32>
    %7 = vector.broadcast %6 : vector<16x1xf32> to vector<16x16xf32>
    %8 = arith.subf %3, %7 : vector<16x16xf32>
    %9 = math.exp %8 : vector<16x16xf32>
    %cst_4 = arith.constant dense<0.000000e+00> : vector<16xf32>
    %10 = vector.multi_reduction <add>, %9, %cst_4 [1] : vector<16x16xf32> to vector<16xf32>
    %11 = vector.shape_cast %10 : vector<16xf32> to vector<16x1xf32>
    %12 = math.log %11 : vector<16x1xf32>
    %13 = arith.addf %6, %12 : vector<16x1xf32>
    %cst_5 = arith.constant dense<0.000000e+00> : vector<16xf32>
    %14 = vector.multi_reduction <add>, %4, %cst_5 [1] : vector<16x16xf32> to vector<16xf32>
    %15 = vector.shape_cast %14 : vector<16xf32> to vector<16x1xf32>
    %16 = arith.mulf %13, %15 : vector<16x1xf32>
    %17 = vector.shape_cast %16 : vector<16x1xf32> to vector<1x16x1xf32>
    %cst_6 = arith.constant dense<0.000000e+00> : vector<1xf32>
    %18 = vector.multi_reduction <add>, %17, %cst_6 [1, 2] : vector<1x16x1xf32> to vector<1xf32>
    %19 = vector.shape_cast %18 : vector<1xf32> to vector<1x1x1xf32>
    %20 = vector.extract %19[0, 0, 0] : f32 from vector<1x1x1xf32>
    %21 = arith.mulf %4, %3 : vector<16x16xf32>
    %22 = vector.shape_cast %21 : vector<16x16xf32> to vector<1x16x16xf32>
    %cst_7 = arith.constant dense<0.000000e+00> : vector<1xf32>
    %23 = vector.multi_reduction <add>, %22, %cst_7 [1, 2] : vector<1x16x16xf32> to vector<1xf32>
    %24 = vector.shape_cast %23 : vector<1xf32> to vector<1x1x1xf32>
    %25 = vector.extract %24[0, 0, 0] : f32 from vector<1x1x1xf32>
    %26 = arith.subf %20, %25 : f32
    %c0_8 = arith.constant 0 : index
    %c0_9 = arith.constant 0 : index
    %27 = memref.load %arg9[%c0_8, %c0_9] : memref<1x1xf32, #tpu.memory_space<smem>>
    %28 = arith.addf %27, %26 : f32
    %c0_10 = arith.constant 0 : index
    %c0_11 = arith.constant 0 : index
    %29 = memref.load %arg9[%c0_10, %c0_11] : memref<1x1xf32, #tpu.memory_space<smem>>
    memref.store %28, %arg9[%c0_10, %c0_11] : memref<1x1xf32, #tpu.memory_space<smem>>
    %c0_12 = arith.constant 0 : index
    %c0_13 = arith.constant 0 : index
    %30 = memref.load %arg9[%c0_12, %c0_13] : memref<1x1xf32, #tpu.memory_space<smem>>
    %c0_14 = arith.constant 0 : index
    %c0_15 = arith.constant 0 : index
    %31 = memref.load %arg8[%c0_14, %c0_15] : memref<1x1xf32, #tpu.memory_space<smem>>
    memref.store %30, %arg8[%c0_14, %c0_15] : memref<1x1xf32, #tpu.memory_space<smem>>
    return
  }
  func.func @transform_0(%arg0: i32, %arg1: memref<2xf32, #tpu.memory_space<smem>>) -> (i32, i32) {
    %c0_i32 = arith.constant 0 : i32
    %c0_i32_0 = arith.constant 0 : i32
    return %arg0, %c0_i32 : i32, i32
  }
  func.func @transform_1(%arg0: i32, %arg1: memref<2xf32, #tpu.memory_space<smem>>) -> (i32, i32) {
    %c0_i32 = arith.constant 0 : i32
    %c0_i32_0 = arith.constant 0 : i32
    return %arg0, %c0_i32 : i32, i32
  }
  func.func @transform_2(%arg0: i32, %arg1: memref<2xf32, #tpu.memory_space<smem>>) -> (i32, i32) {
    %c0_i32 = arith.constant 0 : i32
    %c0_i32_0 = arith.constant 0 : i32
    %c0_i32_1 = arith.constant 0 : i32
    return %c0_i32, %c0_i32_0 : i32, i32
  }
  func.func @transform_3(%arg0: i32, %arg1: memref<2xf32, #tpu.memory_space<smem>>) -> (i32, i32) {
    %c0_i32 = arith.constant 0 : i32
    %c0_i32_0 = arith.constant 0 : i32
    %c0_i32_1 = arith.constant 0 : i32
    return %c0_i32, %c0_i32_0 : i32, i32
  }
  func.func @transform_4(%arg0: i32, %arg1: memref<2xf32, #tpu.memory_space<smem>>) -> (i32, i32) {
    %c0_i32 = arith.constant 0 : i32
    %c0_i32_0 = arith.constant 0 : i32
    %c0_i32_1 = arith.constant 0 : i32
    return %c0_i32, %c0_i32_0 : i32, i32
  }
  func.func @transform_5(%arg0: i32, %arg1: memref<2xf32, #tpu.memory_space<smem>>) -> (i32, i32) {
    %c0_i32 = arith.constant 0 : i32
    %c0_i32_0 = arith.constant 0 : i32
    %c0_i32_1 = arith.constant 0 : i32
    return %c0_i32, %c0_i32_0 : i32, i32
  }
  func.func @transform_6(%arg0: i32, %arg1: memref<2xf32, #tpu.memory_space<smem>>) -> (i32, i32) {
    %c0_i32 = arith.constant 0 : i32
    %c0_i32_0 = arith.constant 0 : i32
    %c0_i32_1 = arith.constant 0 : i32
    return %c0_i32, %c0_i32_0 : i32, i32
  }
}

</mosaic_0001>

<llo_original>
// kernel: tpu_custom_call.1
$region0: #{tpu_custom_call.1}
  #allocation0 [shape = 'u32[]', space=smem, size = 0x4, offset = 0x4, fixed_abs, tag = 'smem constant byte address 0x4 - core index']
  #allocation1 [shape = 'u32[144,128]{1,0:T(1,128)}', space=vmem, size = 0x12000, scoped, tag = 'internal scratch']
  #allocation2 [shape = 'f32[1,1]{1,0:T(1,128)}', space=smem, size = 0x200, scoped, tag = 'scratch operand']
  #allocation3 [shape = 's32[1]{0}', space=sflag, size = 0x4, scoped, tag = 'scoped memory for tpu_custom_call.1']
  #allocation4 [shape = 'u8[512]{0}', space=smem, size = 0x200, scoped, tag = 'prefetched SMEM operand 0']
  %s0 = inlined_call_operand.hbm [shape: f32[2], index: 0, kind: input, shape index: {}]
  %s1 = inlined_call_operand.hbm [shape: f32[16,16], index: 1, kind: input, shape index: {}]
  %s2 = inlined_call_operand.hbm [shape: f32[16,16], index: 2, kind: input, shape index: {}]
  %s3 = inlined_call_operand.vmem [shape: f32[2,4], index: 3, kind: input, shape index: {}]
  %s4 = inlined_call_operand.vmem [shape: f32[2,4], index: 4, kind: input, shape index: {}]
  %s5 = inlined_call_operand.vmem [shape: f32[2,32], index: 5, kind: input, shape index: {}]
  %s6 = inlined_call_operand.vmem [shape: f32[2,32], index: 6, kind: input, shape index: {}]
  %s7 = inlined_call_operand.hbm [shape: f32[1,1], index: 7, kind: output, shape index: {}]
  %s8 = sld [smem:[#allocation0]]
  $region46: #{tpu_custom_call.1} parent=0
    _
  %s10 = ssub.s32 1, %s8
  %s11 = scalar_select 0, %s10, %s8
  %13 = dma.hbm_to_smem %s0, 16, [#allocation4], [#allocation3]
  %14 = dma.done [#allocation3], 16
  %15 = sfence
  $region1: #{tpu_custom_call.1} parent=0
    #allocation5 [shape = 'u8[8192]{0}', space=vmem, size = 0x2000, scoped, tag = 'input window, operand 1, single buffered']
    #allocation6 [shape = 's32[1]{0}', space=sflag, size = 0x4, scoped, tag = 'scoped memory for tpu_custom_call.1']
    #allocation7 [shape = 's32[1]{0}', space=sflag, size = 0x4, scoped, tag = 'scoped memory for tpu_custom_call.1']
    #allocation8 [shape = 'u8[8192]{0}', space=vmem, size = 0x2000, scoped, tag = 'input window, operand 2, single buffered']
    #allocation9 [shape = 's32[1]{0}', space=sflag, size = 0x4, scoped, tag = 'scoped memory for tpu_custom_call.1']
    #allocation10 [shape = 'u8[512]{0}', space=smem, size = 0x200, scoped, tag = 'output window, operand 0, single buffered']
    %16 = vsyncpa [#allocation6], 0
    %17 = vsyncpa [#allocation9], 0
    %18 = vsyncpa [#allocation7], 0
    // Predicated region
    $region2: #{tpu_custom_call.1} parent=1 // pred_check
      _
    $region3: #{tpu_custom_call.1} parent=1 // pred_check_branch
      %20 = sbr.rel (0) target = $region5
    $region4: #{tpu_custom_call.1} parent=1 // pred_region
      %s22 = ssub.s32 256, 256
      %23 = vsyncadd [#allocation6], %s22
      %s24 = sshll.u32 [#allocation5], 4
      %s25 = int_to_ptr.vmem [resolvable:$true] %s24
      %30 = dma.hbm_to_vmem [thread:$0]  %s1, 256, %s25, [#allocation6], 128, 128, 8
    $region5: #{tpu_custom_call.1} parent=1 // pred_fallthru
      _
    // Predicated region
    $region6: #{tpu_custom_call.1} parent=1 // pred_check
      _
    $region7: #{tpu_custom_call.1} parent=1 // pred_check_branch
      %32 = sbr.rel (0) target = $region9
    $region8: #{tpu_custom_call.1} parent=1 // pred_region
      %s34 = ssub.s32 256, 256
      %35 = vsyncadd [#allocation9], %s34
      %s36 = sshll.u32 [#allocation8], 4
      %s37 = int_to_ptr.vmem [resolvable:$true] %s36
      %42 = dma.hbm_to_vmem [thread:$0]  %s2, 256, %s37, [#allocation9], 128, 128, 8
    $region9: #{tpu_custom_call.1} parent=1 // pred_fallthru
      _
    // Predicated region
    $region10: #{tpu_custom_call.1} parent=1 // pred_check
      _
    $region11: #{tpu_custom_call.1} parent=1 // pred_check_branch
      %44 = sbr.rel (0) target = $region13
    $region12: #{tpu_custom_call.1} parent=1 // pred_region
      _
    $region13: #{tpu_custom_call.1} parent=1 // pred_fallthru
      _
    // Predicated region
    $region14: #{tpu_custom_call.1} parent=1 // pred_check
      _
    $region15: #{tpu_custom_call.1} parent=1 // pred_check_branch
      %46 = sbr.rel (0) target = $region17
    $region16: #{tpu_custom_call.1} parent=1 // pred_region
      _
    $region17: #{tpu_custom_call.1} parent=1 // pred_fallthru
      _
    // Predicated region
    $region18: #{tpu_custom_call.1} parent=1 // pred_check
      _
    $region19: #{tpu_custom_call.1} parent=1 // pred_check_branch
      %48 = sbr.rel (0) target = $region21
    $region20: #{tpu_custom_call.1} parent=1 // pred_region
      _
    $region21: #{tpu_custom_call.1} parent=1 // pred_fallthru
      _
    // Predicated region
    $region22: #{tpu_custom_call.1} parent=1 // pred_check
      _
    $region23: #{tpu_custom_call.1} parent=1 // pred_check_branch
      %50 = sbr.rel (0) target = $region25
    $region24: #{tpu_custom_call.1} parent=1 // pred_region
      _
    $region25: #{tpu_custom_call.1} parent=1 // pred_fallthru
      _
    // Predicated region
    $region26: #{tpu_custom_call.1} parent=1 // pred_check
      _
    $region27: #{tpu_custom_call.1} parent=1 // pred_check_branch
      %52 = sbr.rel (0) target = $region29
    $region28: #{tpu_custom_call.1} parent=1 // pred_region
      %53 = dma.done [#allocation6], 256
    $region29: #{tpu_custom_call.1} parent=1 // pred_fallthru
      _
    // Predicated region
    $region30: #{tpu_custom_call.1} parent=1 // pred_check
      _
    $region31: #{tpu_custom_call.1} parent=1 // pred_check_branch
      %55 = sbr.rel (0) target = $region33
    $region32: #{tpu_custom_call.1} parent=1 // pred_region
      %56 = dma.done [#allocation9], 256
    $region33: #{tpu_custom_call.1} parent=1 // pred_fallthru
      _
    %p57 = scmp.eq.s32.totalorder 0, 0
    // Predicated region
    $region34: #{tpu_custom_call.1} parent=1 // pred_check
      %p58 = pneg %p57
    $region35: #{tpu_custom_call.1} parent=1 // pred_check_branch
      %60 = sbr.rel (%p58) target = $region37
    $region36: #{tpu_custom_call.1} parent=1 // pred_region
      %s61 = sld [smem:[#allocation4]]
      %s62 = sld [smem:[#allocation4 + $0x1]]
      %v63 = vld [vmem:[%s5] sm:$0x3]
      %v64 = vld [vmem:[%s6] sm:$0x3]
      %v65 = vadd.f32 %v64, 1.0
      %v66 = vmul.f32 %v63, %v63
      %v67 = vsub.f32 %v65, %v66
      %v68 = vmul.f32 %v64, 1.442695
      %v69 = vpow.pop %v68
      %v70 = vsub.f32 %v67, %v69
      %vm71 = vcmask 254976
      %v72 = vsel %vm71, %v70, 0.0
      %73 = vadd.xlane.f32.xlu0 %v72
      %v74 = vpop.xlane.xlu0 %73
      %v75 = vrot.slane %v74, 4
      %v76 = vadd.f32 %v74, %v75
      %v77 = vrot.slane %v76, 2
      %v78 = vadd.f32 %v76, %v77
      %v79 = vrot.slane %v78, 1
      %v80 = vadd.f32 %v78, %v79
      %s81 = vtos %v80
      %s82 = smul.f32 %s81, -0.5
      %v83 = vld [vmem:[%s4] sm:$0x3]
      %v84 = vld [vmem:[%s3] sm:$0x3]
      %v85 = vsub.f32 %v83, %v84
      %v86 = vmul.f32 %v85, %v85
      %vm87 = vcmask 25600
      %v88 = vsel %vm87, %v86, 0.0
      %89 = vadd.xlane.f32.xlu0 %v88
      %v90 = vpop.xlane.xlu0 %89
      %v91 = vrot.slane %v90, 4
      %v92 = vadd.f32 %v90, %v91
      %v93 = vrot.slane %v92, 2
      %v94 = vadd.f32 %v92, %v93
      %v95 = vrot.slane %v94, 1
      %v96 = vadd.f32 %v94, %v95
      %s97 = vtos %v96
      %s98 = smul.f32 %s62, %s82
      %s99 = smul.f32 %s61, %s97
      %s100 = sadd.f32 %s98, %s99
      %s101 = scalar_lea.smem [#allocation2], 0
      %102 = sst [smem:[%s101]] %s100
    $region37: #{tpu_custom_call.1} parent=1 // pred_fallthru
      _
    %v103 = vld [vmem:[#allocation8] sm:$0xff]
    %v104 = vld [vmem:[#allocation8 + $0x8] sm:$0xff]
    %v105 = vld [vmem:[#allocation5] sm:$0xff]
    %v106 = vld [vmem:[#allocation5 + $0x8] sm:$0xff]
    %vm107 = vcmask 130048
    %v108 = vsel %vm107, %v103, -inf
    %109 = vmax.xlane.f32.xlu0 %v108
    %v110 = vpop.xlane.xlu0 %109
    %v111 = vsel %vm107, %v104, -inf
    %112 = vmax.xlane.f32.xlu0 %v111
    %v113 = vpop.xlane.xlu0 %112
    %v114 = vsub.f32 %v103, %v110
    %v115 = vsub.f32 %v104, %v113
    %v116 = vmul.f32 %v114, 1.442695
    %v117 = vpow.pop %v116
    %v118 = vmul.f32 %v115, 1.442695
    %v119 = vpow.pop %v118
    %v120 = vsel %vm107, %v117, 0.0
    %121 = vadd.xlane.f32.xlu0 %v120
    %v122 = vpop.xlane.xlu0 %121
    %v123 = vsel %vm107, %v119, 0.0
    %124 = vadd.xlane.f32.xlu0 %v123
    %v125 = vpop.xlane.xlu0 %124
    %v126 = vlog2.pop %v122
    %v127 = vmul.f32 %v126, 0.6931472
    %v128 = vlog2.pop %v125
    %v129 = vmul.f32 %v128, 0.6931472
    %v130 = vadd.f32 %v110, %v127
    %v131 = vadd.f32 %v113, %v129
    %v132 = vsel %vm107, %v105, 0.0
    %133 = vadd.xlane.f32.xlu0 %v132
    %v134 = vpop.xlane.xlu0 %133
    %v135 = vsel %vm107, %v106, 0.0
    %136 = vadd.xlane.f32.xlu0 %v135
    %v137 = vpop.xlane.xlu0 %136
    %v138 = vmul.f32 %v130, %v134
    %v139 = vmul.f32 %v131, %v137
    %vm140 = vcmask 7168
    %v141 = vsel %vm140, %v138, 0.0
    %v142 = vsel %vm140, %v139, 0.0
    %v143 = vadd.f32 %v141, %v142
    %144 = vadd.xlane.f32.xlu0 %v143
    %v145 = vpop.xlane.xlu0 %144
    %v146 = vrot.slane %v145, 4
    %v147 = vadd.f32 %v145, %v146
    %v148 = vrot.slane %v147, 2
    %v149 = vadd.f32 %v147, %v148
    %v150 = vrot.slane %v149, 1
    %v151 = vadd.f32 %v149, %v150
    %s152 = vtos %v151
    %v153 = vmul.f32 %v105, %v103
    %v154 = vmul.f32 %v106, %v104
    %v155 = vsel %vm107, %v153, 0.0
    %v156 = vsel %vm107, %v154, 0.0
    %v157 = vadd.f32 %v155, %v156
    %158 = vadd.xlane.f32.xlu0 %v157
    %v159 = vpop.xlane.xlu0 %158
    %v160 = vrot.slane %v159, 4
    %v161 = vadd.f32 %v159, %v160
    %v162 = vrot.slane %v161, 2
    %v163 = vadd.f32 %v161, %v162
    %v164 = vrot.slane %v163, 1
    %v165 = vadd.f32 %v163, %v164
    %s166 = vtos %v165
    %s167 = ssub.f32 %s152, %s166
    %s168 = sld [smem:[#allocation2]]
    %s169 = sadd.f32 %s168, %s167
    %s170 = scalar_lea.smem [#allocation2], 0
    %171 = sst [smem:[%s170]] %s169
    %s172 = sld [smem:[#allocation2]]
    %s173 = scalar_lea.smem [#allocation10], 0
    %174 = sst [smem:[%s173]] %s172
    // Predicated region
    $region38: #{tpu_custom_call.1} parent=1 // pred_check
      _
    $region39: #{tpu_custom_call.1} parent=1 // pred_check_branch
      %176 = sbr.rel (0) target = $region41
    $region40: #{tpu_custom_call.1} parent=1 // pred_region
      %s178 = ssub.s32 16, 16
      %179 = vsyncadd [#allocation7], %s178
      %182 = dma.smem_to_hbm [#allocation10], 16, %s7, [#allocation7]
    $region41: #{tpu_custom_call.1} parent=1 // pred_fallthru
      _
    // Predicated region
    $region42: #{tpu_custom_call.1} parent=1 // pred_check
      _
    $region43: #{tpu_custom_call.1} parent=1 // pred_check_branch
      %184 = sbr.rel (0) target = $region45
    $region44: #{tpu_custom_call.1} parent=1 // pred_region
      %185 = dma.done [#allocation7], 16
    $region45: #{tpu_custom_call.1} parent=1 // pred_fallthru
      _
    %186 = sfence
    %187 = vsyncpa [#allocation6], 1
    %188 = vsyncpa [#allocation9], 1
    %189 = vsyncpa [#allocation7], 1

</llo_original>
